<compile_context>
chip_gen: v7x
topology: tpu7x:2x2x1
jax: 0.10.0
libtpu: 0.0.40
codegen_flags: <defaults>
</compile_context>

<pallas_src>
import functools

import jax
import jax.numpy as jnp
from jax import lax
from jax.experimental import pallas as pl
from jax.experimental.pallas import tpu as pltpu


def resblock_kernel(x_ref, masks_ref, w1_ref, b1_ref, w2_ref, b2_ref, o_ref,
                    stack_ref, *, height, width):
    """One image per grid step.

    x_ref    : (C, HW)      input image (channels on sublanes, flat spatial on lanes)
    masks_ref: (9, 1, HW)   0/1 boundary masks per 3x3 tap (f32), tap index = kh*3 + kw
    w*_ref   : (C, 9*C)     conv weights, K tap-major: col = tap*C + c_in
    b*_ref   : (C, 1)       conv biases (f32)
    o_ref    : (C, HW)      output image
    stack_ref: (9*C, HW)    scratch: stacked rolled+masked taps (matmul operand dtype)
    """
    C, HW = x_ref.shape
    W = width
    del height

    # Tap shifts along the flattened spatial axis: out[p] = inp[(p + dh*W + dw) mod HW].
    shifts = [(-(dh * W + dw)) % HW for dh in (-1, 0, 1) for dw in (-1, 0, 1)]

    # Hoist weight / bias / mask loads: once per grid step, not per conv / per tap.
    w1 = w1_ref[...]
    w2 = w2_ref[...]
    b1 = b1_ref[...].astype(jnp.float32)
    b2 = b2_ref[...].astype(jnp.float32)
    mask_rows = [masks_ref[t] for t in range(9)]            # each (1, HW), f32

    def conv3x3(inp, w, b):
        # Stack the 9 taps along sublanes, then one (C,9C)@(9C,HW) MXU dot with f32 acc.
        for t, s in enumerate(shifts):
            if s == 0:
                tap = inp                                    # center tap: no roll, no mask
            else:
                # Cyclic roll (XLU) + multiplicative boundary mask (one VPU mul)
                # == SAME zero padding.
                tap = pltpu.roll(inp, shift=s, axis=1) * mask_rows[t]
            stack_ref[pl.ds(t * C, C), :] = tap.astype(stack_ref.dtype)
        acc = jnp.dot(w, stack_ref[...], preferred_element_type=jnp.float32)
        return acc + b                                       # bias fused in the epilogue

    x = x_ref[...]
    y = conv3x3(x, w1, b1)
    y = jnp.maximum(y, 0.0)                                  # ReLU between convs (f32)
    y = conv3x3(y, w2, b2)
    out = jnp.maximum(x.astype(jnp.float32) + y, 0.0)        # ReLU(x + block(x))
    o_ref[...] = out.astype(o_ref.dtype)


def _vmem_cap_bytes():
    """~3/4 of this chip's physical VMEM (≈96 MiB v5e/v6e, ≈48 MiB v7x)."""
    try:
        return int(pltpu.get_tpu_info().vmem_capacity_bytes) * 3 // 4
    except Exception:
        return 96 << 20


@functools.partial(jax.jit, static_argnames=("use_bf16_matmul",))
def resblock_forward(x_nchw, w1, b1, w2, b2, use_bf16_matmul=False):
    """x_nchw: (B, C, H, W); w*: (C, C, 3, 3) OIHW; b*: (C,). Returns NCHW."""
    B, C, H, W = x_nchw.shape
    HW = H * W
    in_dtype = x_nchw.dtype
    mm_dtype = jnp.bfloat16 if use_bf16_matmul else in_dtype

    x_flat = x_nchw.reshape(B, C, HW)                        # free reshape, no transpose

    # OIHW -> (C_out, 9*C_in), K tap-major: col = (kh*3 + kw)*C_in + c_in.
    w1_t = jnp.transpose(w1, (0, 2, 3, 1)).reshape(C, 9 * C).astype(mm_dtype)
    w2_t = jnp.transpose(w2, (0, 2, 3, 1)).reshape(C, 9 * C).astype(mm_dtype)
    b1_c = b1.reshape(C, 1).astype(jnp.float32)
    b2_c = b2.reshape(C, 1).astype(jnp.float32)

    # 0/1 boundary masks per tap, precomputed once (f32 so the VPU multiply is native
    # even on v5e). Tap 4 (center) is unused in-kernel but kept for uniform indexing.
    pos = jnp.arange(HW, dtype=jnp.int32)
    h_idx, w_idx = pos // W, pos % W
    rows = []
    for dh in (-1, 0, 1):
        for dw in (-1, 0, 1):
            ok = ((h_idx + dh >= 0) & (h_idx + dh <= H - 1) &
                  (w_idx + dw >= 0) & (w_idx + dw <= W - 1))
            rows.append(ok.astype(jnp.float32))
    masks = jnp.stack(rows, 0).reshape(9, 1, HW)

    # Honest per-step VMEM budget: double-buffered IO blocks + constant-indexed params
    # + stacked-tap scratch + f32 accumulator / intermediates, with 1.5x headroom.
    isz = jnp.dtype(in_dtype).itemsize
    msz = jnp.dtype(mm_dtype).itemsize
    io = 2 * 2 * C * HW * isz                                # in + out, double buffered
    params = 2 * (2 * 9 * C * C * msz + 2 * C * 4 + 9 * HW * 4)
    scratch = 9 * C * HW * msz
    temps = 4 * C * HW * 4                                   # x_f32, y, acc, rolled taps
    est = int((io + params + scratch + temps) * 1.5) + (2 << 20)
    vmem_limit = int(min(max(est, 8 << 20), _vmem_cap_bytes()))

    kernel = functools.partial(resblock_kernel, height=H, width=W)
    out_flat = pl.pallas_call(
        kernel,
        out_shape=jax.ShapeDtypeStruct((B, C, HW), in_dtype),
        grid_spec=pltpu.PrefetchScalarGridSpec(
            num_scalar_prefetch=0,
            grid=(B,),
            in_specs=[
                pl.BlockSpec((None, C, HW), lambda b: (b, 0, 0)),   # x, batch squeezed
                pl.BlockSpec((9, 1, HW), lambda b: (0, 0, 0)),      # boundary masks
                pl.BlockSpec((C, 9 * C), lambda b: (0, 0)),         # w1
                pl.BlockSpec((C, 1), lambda b: (0, 0)),             # b1
                pl.BlockSpec((C, 9 * C), lambda b: (0, 0)),         # w2
                pl.BlockSpec((C, 1), lambda b: (0, 0)),             # b2
            ],
            out_specs=pl.BlockSpec((None, C, HW), lambda b: (b, 0, 0)),
            scratch_shapes=[pltpu.VMEM((9 * C, HW), mm_dtype)],
        ),
        compiler_params=pltpu.CompilerParams(
            dimension_semantics=("parallel",),
            vmem_limit_bytes=vmem_limit,
        ),
    )(x_flat, masks, w1_t, b1_c, w2_t, b2_c)

    return out_flat.reshape(B, C, H, W)                      # free reshape back to NCHW


def resblock_reference(x_nchw, w1, b1, w2, b2):
    """Pure-JAX reference mirroring PyTorch semantics (NCHW / OIHW)."""
    dn = lax.conv_dimension_numbers(x_nchw.shape, w1.shape,
                                    ("NCHW", "OIHW", "NCHW"))
    y = lax.conv_general_dilated(x_nchw, w1, (1, 1), "SAME", dimension_numbers=dn)
    y = y + b1[None, :, None, None]
    y = jnp.maximum(y, 0.0)
    y = lax.conv_general_dilated(y, w2, (1, 1), "SAME", dimension_numbers=dn)
    y = y + b2[None, :, None, None]
    return jnp.maximum(x_nchw + y, 0.0)


def init_params(key, channels):
    """Deterministic init matching PyTorch Conv2d default (kaiming-uniform-ish)."""
    fan_in = channels * 3 * 3
    bound = 1.0 / jnp.sqrt(fan_in)
    k1, k2, k3, k4 = jax.random.split(key, 4)
    w1 = jax.random.uniform(k1, (channels, channels, 3, 3), jnp.float32, -bound, bound)
    b1 = jax.random.uniform(k2, (channels,), jnp.float32, -bound, bound)
    w2 = jax.random.uniform(k3, (channels, channels, 3, 3), jnp.float32, -bound, bound)
    b2 = jax.random.uniform(k4, (channels,), jnp.float32, -bound, bound)
    return w1, b1, w2, b2


if __name__ == "__main__":
    B, C, H, W = 2, 4, 16, 16
    key = jax.random.PRNGKey(0)
    kx, kp = jax.random.split(key)
    x = jax.random.normal(kx, (B, C, H, W), jnp.float32)
    w1, b1, w2, b2 = init_params(kp, C)

    out = resblock_forward(x, w1, b1, w2, b2)
    out = jax.block_until_ready(out)

    ref = resblock_reference(x, w1, b1, w2, b2)
    assert out.shape == (B, C, H, W)
    assert jnp.allclose(out, ref, atol=1e-4, rtol=1e-4), float(jnp.max(jnp.abs(out - ref)))
    print("KERNEL_OK")
</pallas_src>

<mosaic_0001>
module attributes {stable_mosaic.version = 11 : i64} {
  func.func @resblock_kernel(%arg0: i32, %arg1: memref<1x4x256xf32, #tpu.memory_space<vmem>>, %arg2: memref<9x1x256xf32, #tpu.memory_space<vmem>>, %arg3: memref<4x36xf32, #tpu.memory_space<vmem>>, %arg4: memref<4x1xf32, #tpu.memory_space<vmem>>, %arg5: memref<4x36xf32, #tpu.memory_space<vmem>>, %arg6: memref<4x1xf32, #tpu.memory_space<vmem>>, %arg7: memref<1x4x256xf32, #tpu.memory_space<vmem>>, %arg8: memref<36x256xf32, #tpu.memory_space<vmem>>) attributes {dimension_semantics = [#tpu.dimension_semantics<parallel>], iteration_bounds = array<i64: 2>, scalar_prefetch = 0 : i64, scratch_operands = 1 : i64, tpu.core_type = #tpu.core_type<tc>, window_params = [{transform_indices = @transform_0, window_bounds = array<i64: 1, 4, 256>}, {pipeline_mode = #tpu.pipeline_mode<synchronous>, transform_indices = @transform_1, window_bounds = array<i64: 9, 1, 256>}, {pipeline_mode = #tpu.pipeline_mode<synchronous>, transform_indices = @transform_2, window_bounds = array<i64: 4, 36>}, {pipeline_mode = #tpu.pipeline_mode<synchronous>, transform_indices = @transform_3, window_bounds = array<i64: 4, 1>}, {pipeline_mode = #tpu.pipeline_mode<synchronous>, transform_indices = @transform_4, window_bounds = array<i64: 4, 36>}, {pipeline_mode = #tpu.pipeline_mode<synchronous>, transform_indices = @transform_5, window_bounds = array<i64: 4, 1>}, {transform_indices = @transform_6, window_bounds = array<i64: 1, 4, 256>}]} {
    %c0 = arith.constant 0 : index
    %c0_0 = arith.constant 0 : index
    %0 = vector.load %arg3[%c0, %c0_0] : memref<4x36xf32, #tpu.memory_space<vmem>>, vector<4x36xf32>
    %c0_1 = arith.constant 0 : index
    %c0_2 = arith.constant 0 : index
    %1 = vector.load %arg5[%c0_1, %c0_2] : memref<4x36xf32, #tpu.memory_space<vmem>>, vector<4x36xf32>
    %c0_3 = arith.constant 0 : index
    %c0_4 = arith.constant 0 : index
    %2 = vector.load %arg4[%c0_3, %c0_4] : memref<4x1xf32, #tpu.memory_space<vmem>>, vector<4x1xf32>
    %c0_5 = arith.constant 0 : index
    %c0_6 = arith.constant 0 : index
    %3 = vector.load %arg6[%c0_5, %c0_6] : memref<4x1xf32, #tpu.memory_space<vmem>>, vector<4x1xf32>
    %c0_7 = arith.constant 0 : index
    %c0_8 = arith.constant 0 : index
    %c0_9 = arith.constant 0 : index
    %4 = vector.load %arg2[%c0_7, %c0_8, %c0_9] : memref<9x1x256xf32, #tpu.memory_space<vmem>>, vector<1x1x256xf32>
    %5 = vector.shape_cast %4 : vector<1x1x256xf32> to vector<1x256xf32>
    %c1 = arith.constant 1 : index
    %c0_10 = arith.constant 0 : index
    %c0_11 = arith.constant 0 : index
    %6 = vector.load %arg2[%c1, %c0_10, %c0_11] : memref<9x1x256xf32, #tpu.memory_space<vmem>>, vector<1x1x256xf32>
    %7 = vector.shape_cast %6 : vector<1x1x256xf32> to vector<1x256xf32>
    %c2 = arith.constant 2 : index
    %c0_12 = arith.constant 0 : index
    %c0_13 = arith.constant 0 : index
    %8 = vector.load %arg2[%c2, %c0_12, %c0_13] : memref<9x1x256xf32, #tpu.memory_space<vmem>>, vector<1x1x256xf32>
    %9 = vector.shape_cast %8 : vector<1x1x256xf32> to vector<1x256xf32>
    %c3 = arith.constant 3 : index
    %c0_14 = arith.constant 0 : index
    %c0_15 = arith.constant 0 : index
    %10 = vector.load %arg2[%c3, %c0_14, %c0_15] : memref<9x1x256xf32, #tpu.memory_space<vmem>>, vector<1x1x256xf32>
    %11 = vector.shape_cast %10 : vector<1x1x256xf32> to vector<1x256xf32>
    %c5 = arith.constant 5 : index
    %c0_16 = arith.constant 0 : index
    %c0_17 = arith.constant 0 : index
    %12 = vector.load %arg2[%c5, %c0_16, %c0_17] : memref<9x1x256xf32, #tpu.memory_space<vmem>>, vector<1x1x256xf32>
    %13 = vector.shape_cast %12 : vector<1x1x256xf32> to vector<1x256xf32>
    %c6 = arith.constant 6 : index
    %c0_18 = arith.constant 0 : index
    %c0_19 = arith.constant 0 : index
    %14 = vector.load %arg2[%c6, %c0_18, %c0_19] : memref<9x1x256xf32, #tpu.memory_space<vmem>>, vector<1x1x256xf32>
    %15 = vector.shape_cast %14 : vector<1x1x256xf32> to vector<1x256xf32>
    %c7 = arith.constant 7 : index
    %c0_20 = arith.constant 0 : index
    %c0_21 = arith.constant 0 : index
    %16 = vector.load %arg2[%c7, %c0_20, %c0_21] : memref<9x1x256xf32, #tpu.memory_space<vmem>>, vector<1x1x256xf32>
    %17 = vector.shape_cast %16 : vector<1x1x256xf32> to vector<1x256xf32>
    %c8 = arith.constant 8 : index
    %c0_22 = arith.constant 0 : index
    %c0_23 = arith.constant 0 : index
    %18 = vector.load %arg2[%c8, %c0_22, %c0_23] : memref<9x1x256xf32, #tpu.memory_space<vmem>>, vector<1x1x256xf32>
    %19 = vector.shape_cast %18 : vector<1x1x256xf32> to vector<1x256xf32>
    %c0_24 = arith.constant 0 : index
    %c0_25 = arith.constant 0 : index
    %c0_26 = arith.constant 0 : index
    %20 = vector.load %arg1[%c0_24, %c0_25, %c0_26] : memref<1x4x256xf32, #tpu.memory_space<vmem>>, vector<1x4x256xf32>
    %21 = vector.shape_cast %20 : vector<1x4x256xf32> to vector<4x256xf32>
    %c17_i32 = arith.constant 17 : i32
    %22 = tpu.dynamic_rotate %21 by %c17_i32 dim 1 : vector<4x256xf32>, i32 -> vector<4x256xf32>
    %23 = vector.broadcast %5 : vector<1x256xf32> to vector<4x256xf32>
    %24 = arith.mulf %22, %23 : vector<4x256xf32>
    %c0_27 = arith.constant 0 : index
    %c0_28 = arith.constant 0 : index
    %25 = vector.load %arg8[%c0_27, %c0_28] : memref<36x256xf32, #tpu.memory_space<vmem>>, vector<4x256xf32>
    tpu.vector_store %arg8[%c0_27, %c0_28], %24 {strides = array<i32>} : memref<36x256xf32, #tpu.memory_space<vmem>>, vector<4x256xf32>,
    %c16_i32 = arith.constant 16 : i32
    %26 = tpu.dynamic_rotate %21 by %c16_i32 dim 1 : vector<4x256xf32>, i32 -> vector<4x256xf32>
    %27 = vector.broadcast %7 : vector<1x256xf32> to vector<4x256xf32>
    %28 = arith.mulf %26, %27 : vector<4x256xf32>
    %c4 = arith.constant 4 : index
    %c0_29 = arith.constant 0 : index
    %29 = vector.load %arg8[%c4, %c0_29] : memref<36x256xf32, #tpu.memory_space<vmem>>, vector<4x256xf32>
    tpu.vector_store %arg8[%c4, %c0_29], %28 {strides = array<i32>} : memref<36x256xf32, #tpu.memory_space<vmem>>, vector<4x256xf32>,
    %c15_i32 = arith.constant 15 : i32
    %30 = tpu.dynamic_rotate %21 by %c15_i32 dim 1 : vector<4x256xf32>, i32 -> vector<4x256xf32>
    %31 = vector.broadcast %9 : vector<1x256xf32> to vector<4x256xf32>
    %32 = arith.mulf %30, %31 : vector<4x256xf32>
    %c8_30 = arith.constant 8 : index
    %c0_31 = arith.constant 0 : index
    %33 = vector.load %arg8[%c8_30, %c0_31] : memref<36x256xf32, #tpu.memory_space<vmem>>, vector<4x256xf32>
    tpu.vector_store %arg8[%c8_30, %c0_31], %32 {strides = array<i32>} : memref<36x256xf32, #tpu.memory_space<vmem>>, vector<4x256xf32>,
    %c1_i32 = arith.constant 1 : i32
    %34 = tpu.dynamic_rotate %21 by %c1_i32 dim 1 : vector<4x256xf32>, i32 -> vector<4x256xf32>
    %35 = vector.broadcast %11 : vector<1x256xf32> to vector<4x256xf32>
    %36 = arith.mulf %34, %35 : vector<4x256xf32>
    %c12 = arith.constant 12 : index
    %c0_32 = arith.constant 0 : index
    %37 = vector.load %arg8[%c12, %c0_32] : memref<36x256xf32, #tpu.memory_space<vmem>>, vector<4x256xf32>
    tpu.vector_store %arg8[%c12, %c0_32], %36 {strides = array<i32>} : memref<36x256xf32, #tpu.memory_space<vmem>>, vector<4x256xf32>,
    %c16 = arith.constant 16 : index
    %c0_33 = arith.constant 0 : index
    %38 = vector.load %arg8[%c16, %c0_33] : memref<36x256xf32, #tpu.memory_space<vmem>>, vector<4x256xf32>
    tpu.vector_store %arg8[%c16, %c0_33], %21 {strides = array<i32>} : memref<36x256xf32, #tpu.memory_space<vmem>>, vector<4x256xf32>,
    %c255_i32 = arith.constant 255 : i32
    %39 = tpu.dynamic_rotate %21 by %c255_i32 dim 1 : vector<4x256xf32>, i32 -> vector<4x256xf32>
    %40 = vector.broadcast %13 : vector<1x256xf32> to vector<4x256xf32>
    %41 = arith.mulf %39, %40 : vector<4x256xf32>
    %c20 = arith.constant 20 : index
    %c0_34 = arith.constant 0 : index
    %42 = vector.load %arg8[%c20, %c0_34] : memref<36x256xf32, #tpu.memory_space<vmem>>, vector<4x256xf32>
    tpu.vector_store %arg8[%c20, %c0_34], %41 {strides = array<i32>} : memref<36x256xf32, #tpu.memory_space<vmem>>, vector<4x256xf32>,
    %c241_i32 = arith.constant 241 : i32
    %43 = tpu.dynamic_rotate %21 by %c241_i32 dim 1 : vector<4x256xf32>, i32 -> vector<4x256xf32>
    %44 = vector.broadcast %15 : vector<1x256xf32> to vector<4x256xf32>
    %45 = arith.mulf %43, %44 : vector<4x256xf32>
    %c24 = arith.constant 24 : index
    %c0_35 = arith.constant 0 : index
    %46 = vector.load %arg8[%c24, %c0_35] : memref<36x256xf32, #tpu.memory_space<vmem>>, vector<4x256xf32>
    tpu.vector_store %arg8[%c24, %c0_35], %45 {strides = array<i32>} : memref<36x256xf32, #tpu.memory_space<vmem>>, vector<4x256xf32>,
    %c240_i32 = arith.constant 240 : i32
    %47 = tpu.dynamic_rotate %21 by %c240_i32 dim 1 : vector<4x256xf32>, i32 -> vector<4x256xf32>
    %48 = vector.broadcast %17 : vector<1x256xf32> to vector<4x256xf32>
    %49 = arith.mulf %47, %48 : vector<4x256xf32>
    %c28 = arith.constant 28 : index
    %c0_36 = arith.constant 0 : index
    %50 = vector.load %arg8[%c28, %c0_36] : memref<36x256xf32, #tpu.memory_space<vmem>>, vector<4x256xf32>
    tpu.vector_store %arg8[%c28, %c0_36], %49 {strides = array<i32>} : memref<36x256xf32, #tpu.memory_space<vmem>>, vector<4x256xf32>,
    %c239_i32 = arith.constant 239 : i32
    %51 = tpu.dynamic_rotate %21 by %c239_i32 dim 1 : vector<4x256xf32>, i32 -> vector<4x256xf32>
    %52 = vector.broadcast %19 : vector<1x256xf32> to vector<4x256xf32>
    %53 = arith.mulf %51, %52 : vector<4x256xf32>
    %c32 = arith.constant 32 : index
    %c0_37 = arith.constant 0 : index
    %54 = vector.load %arg8[%c32, %c0_37] : memref<36x256xf32, #tpu.memory_space<vmem>>, vector<4x256xf32>
    tpu.vector_store %arg8[%c32, %c0_37], %53 {strides = array<i32>} : memref<36x256xf32, #tpu.memory_space<vmem>>, vector<4x256xf32>,
    %c0_38 = arith.constant 0 : index
    %c0_39 = arith.constant 0 : index
    %55 = vector.load %arg8[%c0_38, %c0_39] : memref<36x256xf32, #tpu.memory_space<vmem>>, vector<36x256xf32>
    %cst = arith.constant dense<0.000000e+00> : vector<4x256xf32>
    %56 = tpu.matmul %0, %55, %cst {dimension_numbers = #tpu.dot_dimension_numbers<[1], [0], [0], [1], [0, 0, 1, 1], [], []>} : vector<4x36xf32>, vector<36x256xf32>, vector<4x256xf32> -> vector<4x256xf32>
    %57 = vector.broadcast %2 : vector<4x1xf32> to vector<4x256xf32>
    %58 = arith.addf %56, %57 : vector<4x256xf32>
    %cst_40 = arith.constant 0.000000e+00 : f32
    %59 = vector.broadcast %cst_40 : f32 to vector<4x256xf32>
    %60 = arith.maximumf %58, %59 : vector<4x256xf32>
    %c17_i32_41 = arith.constant 17 : i32
    %61 = tpu.dynamic_rotate %60 by %c17_i32_41 dim 1 : vector<4x256xf32>, i32 -> vector<4x256xf32>
    %62 = vector.broadcast %5 : vector<1x256xf32> to vector<4x256xf32>
    %63 = arith.mulf %61, %62 : vector<4x256xf32>
    %c0_42 = arith.constant 0 : index
    %c0_43 = arith.constant 0 : index
    %64 = vector.load %arg8[%c0_42, %c0_43] : memref<36x256xf32, #tpu.memory_space<vmem>>, vector<4x256xf32>
    tpu.vector_store %arg8[%c0_42, %c0_43], %63 {strides = array<i32>} : memref<36x256xf32, #tpu.memory_space<vmem>>, vector<4x256xf32>,
    %c16_i32_44 = arith.constant 16 : i32
    %65 = tpu.dynamic_rotate %60 by %c16_i32_44 dim 1 : vector<4x256xf32>, i32 -> vector<4x256xf32>
    %66 = vector.broadcast %7 : vector<1x256xf32> to vector<4x256xf32>
    %67 = arith.mulf %65, %66 : vector<4x256xf32>
    %c4_45 = arith.constant 4 : index
    %c0_46 = arith.constant 0 : index
    %68 = vector.load %arg8[%c4_45, %c0_46] : memref<36x256xf32, #tpu.memory_space<vmem>>, vector<4x256xf32>
    tpu.vector_store %arg8[%c4_45, %c0_46], %67 {strides = array<i32>} : memref<36x256xf32, #tpu.memory_space<vmem>>, vector<4x256xf32>,
    %c15_i32_47 = arith.constant 15 : i32
    %69 = tpu.dynamic_rotate %60 by %c15_i32_47 dim 1 : vector<4x256xf32>, i32 -> vector<4x256xf32>
    %70 = vector.broadcast %9 : vector<1x256xf32> to vector<4x256xf32>
    %71 = arith.mulf %69, %70 : vector<4x256xf32>
    %c8_48 = arith.constant 8 : index
    %c0_49 = arith.constant 0 : index
    %72 = vector.load %arg8[%c8_48, %c0_49] : memref<36x256xf32, #tpu.memory_space<vmem>>, vector<4x256xf32>
    tpu.vector_store %arg8[%c8_48, %c0_49], %71 {strides = array<i32>} : memref<36x256xf32, #tpu.memory_space<vmem>>, vector<4x256xf32>,
    %c1_i32_50 = arith.constant 1 : i32
    %73 = tpu.dynamic_rotate %60 by %c1_i32_50 dim 1 : vector<4x256xf32>, i32 -> vector<4x256xf32>
    %74 = vector.broadcast %11 : vector<1x256xf32> to vector<4x256xf32>
    %75 = arith.mulf %73, %74 : vector<4x256xf32>
    %c12_51 = arith.constant 12 : index
    %c0_52 = arith.constant 0 : index
    %76 = vector.load %arg8[%c12_51, %c0_52] : memref<36x256xf32, #tpu.memory_space<vmem>>, vector<4x256xf32>
    tpu.vector_store %arg8[%c12_51, %c0_52], %75 {strides = array<i32>} : memref<36x256xf32, #tpu.memory_space<vmem>>, vector<4x256xf32>,
    %c16_53 = arith.constant 16 : index
    %c0_54 = arith.constant 0 : index
    %77 = vector.load %arg8[%c16_53, %c0_54] : memref<36x256xf32, #tpu.memory_space<vmem>>, vector<4x256xf32>
    tpu.vector_store %arg8[%c16_53, %c0_54], %60 {strides = array<i32>} : memref<36x256xf32, #tpu.memory_space<vmem>>, vector<4x256xf32>,
    %c255_i32_55 = arith.constant 255 : i32
    %78 = tpu.dynamic_rotate %60 by %c255_i32_55 dim 1 : vector<4x256xf32>, i32 -> vector<4x256xf32>
    %79 = vector.broadcast %13 : vector<1x256xf32> to vector<4x256xf32>
    %80 = arith.mulf %78, %79 : vector<4x256xf32>
    %c20_56 = arith.constant 20 : index
    %c0_57 = arith.constant 0 : index
    %81 = vector.load %arg8[%c20_56, %c0_57] : memref<36x256xf32, #tpu.memory_space<vmem>>, vector<4x256xf32>
    tpu.vector_store %arg8[%c20_56, %c0_57], %80 {strides = array<i32>} : memref<36x256xf32, #tpu.memory_space<vmem>>, vector<4x256xf32>,
    %c241_i32_58 = arith.constant 241 : i32
    %82 = tpu.dynamic_rotate %60 by %c241_i32_58 dim 1 : vector<4x256xf32>, i32 -> vector<4x256xf32>
    %83 = vector.broadcast %15 : vector<1x256xf32> to vector<4x256xf32>
    %84 = arith.mulf %82, %83 : vector<4x256xf32>
    %c24_59 = arith.constant 24 : index
    %c0_60 = arith.constant 0 : index
    %85 = vector.load %arg8[%c24_59, %c0_60] : memref<36x256xf32, #tpu.memory_space<vmem>>, vector<4x256xf32>
    tpu.vector_store %arg8[%c24_59, %c0_60], %84 {strides = array<i32>} : memref<36x256xf32, #tpu.memory_space<vmem>>, vector<4x256xf32>,
    %c240_i32_61 = arith.constant 240 : i32
    %86 = tpu.dynamic_rotate %60 by %c240_i32_61 dim 1 : vector<4x256xf32>, i32 -> vector<4x256xf32>
    %87 = vector.broadcast %17 : vector<1x256xf32> to vector<4x256xf32>
    %88 = arith.mulf %86, %87 : vector<4x256xf32>
    %c28_62 = arith.constant 28 : index
    %c0_63 = arith.constant 0 : index
    %89 = vector.load %arg8[%c28_62, %c0_63] : memref<36x256xf32, #tpu.memory_space<vmem>>, vector<4x256xf32>
    tpu.vector_store %arg8[%c28_62, %c0_63], %88 {strides = array<i32>} : memref<36x256xf32, #tpu.memory_space<vmem>>, vector<4x256xf32>,
    %c239_i32_64 = arith.constant 239 : i32
    %90 = tpu.dynamic_rotate %60 by %c239_i32_64 dim 1 : vector<4x256xf32>, i32 -> vector<4x256xf32>
    %91 = vector.broadcast %19 : vector<1x256xf32> to vector<4x256xf32>
    %92 = arith.mulf %90, %91 : vector<4x256xf32>
    %c32_65 = arith.constant 32 : index
    %c0_66 = arith.constant 0 : index
    %93 = vector.load %arg8[%c32_65, %c0_66] : memref<36x256xf32, #tpu.memory_space<vmem>>, vector<4x256xf32>
    tpu.vector_store %arg8[%c32_65, %c0_66], %92 {strides = array<i32>} : memref<36x256xf32, #tpu.memory_space<vmem>>, vector<4x256xf32>,
    %c0_67 = arith.constant 0 : index
    %c0_68 = arith.constant 0 : index
    %94 = vector.load %arg8[%c0_67, %c0_68] : memref<36x256xf32, #tpu.memory_space<vmem>>, vector<36x256xf32>
    %cst_69 = arith.constant dense<0.000000e+00> : vector<4x256xf32>
    %95 = tpu.matmul %1, %94, %cst_69 {dimension_numbers = #tpu.dot_dimension_numbers<[1], [0], [0], [1], [0, 0, 1, 1], [], []>} : vector<4x36xf32>, vector<36x256xf32>, vector<4x256xf32> -> vector<4x256xf32>
    %96 = vector.broadcast %3 : vector<4x1xf32> to vector<4x256xf32>
    %97 = arith.addf %95, %96 : vector<4x256xf32>
    %98 = arith.addf %21, %97 : vector<4x256xf32>
    %cst_70 = arith.constant 0.000000e+00 : f32
    %99 = vector.broadcast %cst_70 : f32 to vector<4x256xf32>
    %100 = arith.maximumf %98, %99 : vector<4x256xf32>
    %c0_71 = arith.constant 0 : index
    %c0_72 = arith.constant 0 : index
    %c0_73 = arith.constant 0 : index
    %101 = vector.load %arg7[%c0_71, %c0_72, %c0_73] : memref<1x4x256xf32, #tpu.memory_space<vmem>>, vector<1x4x256xf32>
    %102 = vector.shape_cast %101 : vector<1x4x256xf32> to vector<4x256xf32>
    %103 = vector.shape_cast %100 : vector<4x256xf32> to vector<1x4x256xf32>
    tpu.vector_store %arg7[%c0_71, %c0_72, %c0_73], %103 {strides = array<i32>} : memref<1x4x256xf32, #tpu.memory_space<vmem>>, vector<1x4x256xf32>,
    return
  }
  func.func @transform_0(%arg0: i32) -> (i32, i32, i32) {
    %c0_i32 = arith.constant 0 : i32
    %c0_i32_0 = arith.constant 0 : i32
    %c0_i32_1 = arith.constant 0 : i32
    return %arg0, %c0_i32, %c0_i32_0 : i32, i32, i32
  }
  func.func @transform_1(%arg0: i32) -> (i32, i32, i32) {
    %c0_i32 = arith.constant 0 : i32
    %c0_i32_0 = arith.constant 0 : i32
    %c0_i32_1 = arith.constant 0 : i32
    %c0_i32_2 = arith.constant 0 : i32
    return %c0_i32, %c0_i32_0, %c0_i32_1 : i32, i32, i32
  }
  func.func @transform_2(%arg0: i32) -> (i32, i32) {
    %c0_i32 = arith.constant 0 : i32
    %c0_i32_0 = arith.constant 0 : i32
    %c0_i32_1 = arith.constant 0 : i32
    return %c0_i32, %c0_i32_0 : i32, i32
  }
  func.func @transform_3(%arg0: i32) -> (i32, i32) {
    %c0_i32 = arith.constant 0 : i32
    %c0_i32_0 = arith.constant 0 : i32
    %c0_i32_1 = arith.constant 0 : i32
    return %c0_i32, %c0_i32_0 : i32, i32
  }
  func.func @transform_4(%arg0: i32) -> (i32, i32) {
    %c0_i32 = arith.constant 0 : i32
    %c0_i32_0 = arith.constant 0 : i32
    %c0_i32_1 = arith.constant 0 : i32
    return %c0_i32, %c0_i32_0 : i32, i32
  }
  func.func @transform_5(%arg0: i32) -> (i32, i32) {
    %c0_i32 = arith.constant 0 : i32
    %c0_i32_0 = arith.constant 0 : i32
    %c0_i32_1 = arith.constant 0 : i32
    return %c0_i32, %c0_i32_0 : i32, i32
  }
  func.func @transform_6(%arg0: i32) -> (i32, i32, i32) {
    %c0_i32 = arith.constant 0 : i32
    %c0_i32_0 = arith.constant 0 : i32
    %c0_i32_1 = arith.constant 0 : i32
    return %arg0, %c0_i32, %c0_i32_0 : i32, i32, i32
  }
}

</mosaic_0001>

<llo_original>
// kernel: resblock_forward.1
$region0: #{resblock_forward.1}
  #allocation0 [shape = 'u32[]', space=smem, size = 0x4, offset = 0x4, fixed_abs, tag = 'smem constant byte address 0x4 - core index']
  #allocation1 [shape = 'u32[144,128]{1,0:T(1,128)}', space=vmem, size = 0x12000, scoped, tag = 'internal scratch']
  #allocation2 [shape = 'f32[36,256]{1,0:T(8,128)}', space=vmem, size = 0xa000, scoped, tag = 'scratch operand']
  %s0 = inlined_call_operand.vmem [shape: f32[2,4,256], index: 0, kind: input, shape index: {}]
  %s1 = inlined_call_operand.vmem [shape: f32[9,1,256], index: 1, kind: input, shape index: {}]
  %s2 = inlined_call_operand.vmem [shape: f32[4,36], index: 2, kind: input, shape index: {}]
  %s3 = inlined_call_operand.vmem [shape: f32[4,1], index: 3, kind: input, shape index: {}]
  %s4 = inlined_call_operand.vmem [shape: f32[4,36], index: 4, kind: input, shape index: {}]
  %s5 = inlined_call_operand.vmem [shape: f32[4,1], index: 5, kind: input, shape index: {}]
  %s6 = inlined_call_operand.vmem [shape: f32[2,4,256], index: 6, kind: output, shape index: {}]
  %s7 = sld [smem:[#allocation0]]
  $region57: #{resblock_forward.1} parent=0
    _
  %s9 = ssub.s32 1, %s7
  %s10 = scalar_select 0, %s9, %s7
  loop: start=0, step=1, limit=4
  $region2: #{resblock_forward.1} parent=0 // loop_pre_header
    _
  $region3: #{resblock_forward.1} parent=0 // loop_header
    %s12 = sphi 0, %s16
    %p13 = scmp.ge.s32.totalorder %s12, 4
    %s22 = sphi 0, %s24
    %s25 = sphi 0, %s22
    %s26 = sphi 0, %s25
    %s42 = sphi 0, %s26
    %s46 = sphi 0, %s46
    %s48 = sphi 0, %s46
    %s49 = sphi 0, %s48
    %s63 = sphi 0, %s49
    %s67 = sphi 0, %s67
    %s69 = sphi 0, %s67
    %s70 = sphi 0, %s69
    %s84 = sphi 0, %s70
    %s88 = sphi 0, %s88
    %s90 = sphi 0, %s88
    %s91 = sphi 0, %s90
    %s105 = sphi 0, %s91
    %s109 = sphi 0, %s109
    %s111 = sphi 0, %s109
    %s112 = sphi 0, %s111
    %s126 = sphi 0, %s112
    %s130 = sphi 0, %s130
    %s132 = sphi 0, %s130
    %s133 = sphi 0, %s132
    %s147 = sphi 0, %s133
    %s153 = sphi 0, %s155
    %s156 = sphi 0, %s153
    %s157 = sphi 0, %s156
    %s173 = sphi 0, %s157
  $region4: #{resblock_forward.1} parent=0 // loop_header_branch
    %15 = sbr.rel (%p13) target = $region8
  $region5: #{resblock_forward.1} parent=0 // loop_body
    %s17 = ssub.s32 %s12, 1
    %s18 = ssub.s32 %s12, 2
    %s19 = sadd.s32 %s12, 1
    %s20 = ssub.s32 %s12, %s19
    %p21 = scmp.eq.s32.totalorder %s20, 0
    %s23 = sadd.s32 %s22, 1
    %s24 = scalar_select %p21, %s22, %s23
    %p27 = pneg %p21
    %p28 = scmp.eq.s32.totalorder %s12, 1
    %p29 = por %p27, %p28
    %p30 = scmp.ne.s32.totalorder %s22, %s25
    %p31 = scmp.eq.s32.totalorder %s12, 0
    %p32 = por %p30, %p31
    %p33 = scmp.ne.s32.totalorder %s22, %s25
    %p34 = scmp.eq.s32.totalorder %s17, 1
    %p35 = por %p33, %p34
    %p36 = scmp.ne.s32.totalorder %s25, %s26
    %p37 = scmp.eq.s32.totalorder %s17, 0
    %p38 = por %p36, %p37
    %p39 = scmp.ne.s32.totalorder %s25, %s26
    %p40 = scmp.eq.s32.totalorder %s18, 1
    %p41 = por %p39, %p40
    %p43 = scmp.ne.s32.totalorder %s26, %s42
    %p44 = scmp.eq.s32.totalorder %s18, 0
    %p45 = por %p43, %p44
    %s47 = sadd.s32 %s46, 1
    %p50 = scmp.eq.s32.totalorder %s12, 1
    %p51 = scmp.ne.s32.totalorder %s46, %s48
    %p52 = scmp.eq.s32.totalorder %s12, 0
    %p53 = por %p51, %p52
    %p54 = scmp.ne.s32.totalorder %s46, %s48
    %p55 = scmp.eq.s32.totalorder %s17, 1
    %p56 = por %p54, %p55
    %p57 = scmp.ne.s32.totalorder %s48, %s49
    %p58 = scmp.eq.s32.totalorder %s17, 0
    %p59 = por %p57, %p58
    %p60 = scmp.ne.s32.totalorder %s48, %s49
    %p61 = scmp.eq.s32.totalorder %s18, 1
    %p62 = por %p60, %p61
    %p64 = scmp.ne.s32.totalorder %s49, %s63
    %p65 = scmp.eq.s32.totalorder %s18, 0
    %p66 = por %p64, %p65
    %s68 = sadd.s32 %s67, 1
    %p71 = scmp.eq.s32.totalorder %s12, 1
    %p72 = scmp.ne.s32.totalorder %s67, %s69
    %p73 = scmp.eq.s32.totalorder %s12, 0
    %p74 = por %p72, %p73
    %p75 = scmp.ne.s32.totalorder %s67, %s69
    %p76 = scmp.eq.s32.totalorder %s17, 1
    %p77 = por %p75, %p76
    %p78 = scmp.ne.s32.totalorder %s69, %s70
    %p79 = scmp.eq.s32.totalorder %s17, 0
    %p80 = por %p78, %p79
    %p81 = scmp.ne.s32.totalorder %s69, %s70
    %p82 = scmp.eq.s32.totalorder %s18, 1
    %p83 = por %p81, %p82
    %p85 = scmp.ne.s32.totalorder %s70, %s84
    %p86 = scmp.eq.s32.totalorder %s18, 0
    %p87 = por %p85, %p86
    %s89 = sadd.s32 %s88, 1
    %p92 = scmp.eq.s32.totalorder %s12, 1
    %p93 = scmp.ne.s32.totalorder %s88, %s90
    %p94 = scmp.eq.s32.totalorder %s12, 0
    %p95 = por %p93, %p94
    %p96 = scmp.ne.s32.totalorder %s88, %s90
    %p97 = scmp.eq.s32.totalorder %s17, 1
    %p98 = por %p96, %p97
    %p99 = scmp.ne.s32.totalorder %s90, %s91
    %p100 = scmp.eq.s32.totalorder %s17, 0
    %p101 = por %p99, %p100
    %p102 = scmp.ne.s32.totalorder %s90, %s91
    %p103 = scmp.eq.s32.totalorder %s18, 1
    %p104 = por %p102, %p103
    %p106 = scmp.ne.s32.totalorder %s91, %s105
    %p107 = scmp.eq.s32.totalorder %s18, 0
    %p108 = por %p106, %p107
    %s110 = sadd.s32 %s109, 1
    %p113 = scmp.eq.s32.totalorder %s12, 1
    %p114 = scmp.ne.s32.totalorder %s109, %s111
    %p115 = scmp.eq.s32.totalorder %s12, 0
    %p116 = por %p114, %p115
    %p117 = scmp.ne.s32.totalorder %s109, %s111
    %p118 = scmp.eq.s32.totalorder %s17, 1
    %p119 = por %p117, %p118
    %p120 = scmp.ne.s32.totalorder %s111, %s112
    %p121 = scmp.eq.s32.totalorder %s17, 0
    %p122 = por %p120, %p121
    %p123 = scmp.ne.s32.totalorder %s111, %s112
    %p124 = scmp.eq.s32.totalorder %s18, 1
    %p125 = por %p123, %p124
    %p127 = scmp.ne.s32.totalorder %s112, %s126
    %p128 = scmp.eq.s32.totalorder %s18, 0
    %p129 = por %p127, %p128
    %s131 = sadd.s32 %s130, 1
    %p134 = scmp.eq.s32.totalorder %s12, 1
    %p135 = scmp.ne.s32.totalorder %s130, %s132
    %p136 = scmp.eq.s32.totalorder %s12, 0
    %p137 = por %p135, %p136
    %p138 = scmp.ne.s32.totalorder %s130, %s132
    %p139 = scmp.eq.s32.totalorder %s17, 1
    %p140 = por %p138, %p139
    %p141 = scmp.ne.s32.totalorder %s132, %s133
    %p142 = scmp.eq.s32.totalorder %s17, 0
    %p143 = por %p141, %p142
    %p144 = scmp.ne.s32.totalorder %s132, %s133
    %p145 = scmp.eq.s32.totalorder %s18, 1
    %p146 = por %p144, %p145
    %p148 = scmp.ne.s32.totalorder %s133, %s147
    %p149 = scmp.eq.s32.totalorder %s18, 0
    %p150 = por %p148, %p149
    %s151 = ssub.s32 %s12, %s19
    %p152 = scmp.eq.s32.totalorder %s151, 0
    %s154 = sadd.s32 %s153, 1
    %s155 = scalar_select %p152, %s153, %s154
    %p158 = pneg %p152
    %p159 = scmp.eq.s32.totalorder %s12, 1
    %p160 = por %p158, %p159
    %p161 = scmp.ne.s32.totalorder %s153, %s156
    %p162 = scmp.eq.s32.totalorder %s12, 0
    %p163 = por %p161, %p162
    %p164 = scmp.ne.s32.totalorder %s153, %s156
    %p165 = scmp.eq.s32.totalorder %s17, 1
    %p166 = por %p164, %p165
    %p167 = scmp.ne.s32.totalorder %s156, %s157
    %p168 = scmp.eq.s32.totalorder %s17, 0
    %p169 = por %p167, %p168
    %p170 = scmp.ne.s32.totalorder %s156, %s157
    %p171 = scmp.eq.s32.totalorder %s18, 1
    %p172 = por %p170, %p171
    %p174 = scmp.ne.s32.totalorder %s157, %s173
    %p175 = scmp.eq.s32.totalorder %s18, 0
    %p176 = por %p174, %p175
    %p177 = scmp.le.s32.totalorder 1, %s12
    %p178 = scmp.lt.s32.totalorder %s12, 3
    %p179 = pnand %p177, %p178
    %p180 = pneg %p179
    // Predicated region
    $region9: #{resblock_forward.1} parent=5 // pred_check
      _
    $region10: #{resblock_forward.1} parent=5 // pred_check_branch
      %182 = sbr.rel (%p179) target = $region12
    $region11: #{resblock_forward.1} parent=5 // pred_region
      %s183 = ssub.s32 %s12, 1
      // Predicated region
      $region13: #{resblock_forward.1} parent=11 // pred_check
        %p184 = pneg %p59
      $region14: #{resblock_forward.1} parent=11 // pred_check_branch
        %186 = sbr.rel (%p184) target = $region16
      $region15: #{resblock_forward.1} parent=11 // pred_region
        _
      $region16: #{resblock_forward.1} parent=11 // pred_fallthru
        _
      // Predicated region
      $region17: #{resblock_forward.1} parent=11 // pred_check
        %p187 = pneg %p80
      $region18: #{resblock_forward.1} parent=11 // pred_check_branch
        %189 = sbr.rel (%p187) target = $region20
      $region19: #{resblock_forward.1} parent=11 // pred_region
        _
      $region20: #{resblock_forward.1} parent=11 // pred_fallthru
        _
      // Predicated region
      $region21: #{resblock_forward.1} parent=11 // pred_check
        %p190 = pneg %p101
      $region22: #{resblock_forward.1} parent=11 // pred_check_branch
        %192 = sbr.rel (%p190) target = $region24
      $region23: #{resblock_forward.1} parent=11 // pred_region
        _
      $region24: #{resblock_forward.1} parent=11 // pred_fallthru
        _
      // Predicated region
      $region25: #{resblock_forward.1} parent=11 // pred_check
        %p193 = pneg %p122
      $region26: #{resblock_forward.1} parent=11 // pred_check_branch
        %195 = sbr.rel (%p193) target = $region28
      $region27: #{resblock_forward.1} parent=11 // pred_region
        _
      $region28: #{resblock_forward.1} parent=11 // pred_fallthru
        _
      // Predicated region
      $region29: #{resblock_forward.1} parent=11 // pred_check
        %p196 = pneg %p143
      $region30: #{resblock_forward.1} parent=11 // pred_check_branch
        %198 = sbr.rel (%p196) target = $region32
      $region31: #{resblock_forward.1} parent=11 // pred_region
        _
      $region32: #{resblock_forward.1} parent=11 // pred_fallthru
        _
    $region12: #{resblock_forward.1} parent=5 // pred_fallthru
      _
    %p199 = scmp.lt.s32.totalorder %s12, 2
    // Predicated region
    $region33: #{resblock_forward.1} parent=5 // pred_check
      %p200 = pneg %p199
    $region34: #{resblock_forward.1} parent=5 // pred_check_branch
      %202 = sbr.rel (%p200) target = $region36
    $region35: #{resblock_forward.1} parent=5 // pred_region
      // Predicated region
      $region37: #{resblock_forward.1} parent=35 // pred_check
        %p203 = pneg %p32
      $region38: #{resblock_forward.1} parent=35 // pred_check_branch
        %205 = sbr.rel (%p203) target = $region40
      $region39: #{resblock_forward.1} parent=35 // pred_region
        %p206 = scmp.lt.s32.totalorder %s12, 1
        %s207 = scalar_select %p206, %s12, 1
        %s208 = smul.addr %s207, 2
        %s209 = smul.addr %s208, 4
        %s210 = scalar_lea.vmem %s0, %s209
      $region40: #{resblock_forward.1} parent=35 // pred_fallthru
        _
    $region36: #{resblock_forward.1} parent=5 // pred_fallthru
      _
    %p211 = scmp.le.s32.totalorder 1, %s12
    %p212 = scmp.lt.s32.totalorder %s12, 3
    %p213 = pnand %p211, %p212
    %p214 = pneg %p213
    // Predicated region
    $region41: #{resblock_forward.1} parent=5 // pred_check
      _
    $region42: #{resblock_forward.1} parent=5 // pred_check_branch
      %216 = sbr.rel (%p213) target = $region44
    $region43: #{resblock_forward.1} parent=5 // pred_region
      %s217 = ssub.s32 %s12, 1
      %p218 = scmp.lt.s32.totalorder %s17, 1
      %s219 = scalar_select %p218, %s17, 1
      %s220 = smul.addr %s219, 2
      %s221 = smul.addr %s220, 4
      %s222 = scalar_lea.vmem %s0, %s221
      %p223 = pneg %p38
      %p224 = pneg %p35
      %p225 = pneg %p59
      %p226 = pneg %p56
      %p227 = pneg %p80
      %p228 = pneg %p77
      %p229 = pneg %p101
      %p230 = pneg %p98
      %p231 = pneg %p122
      %p232 = pneg %p119
      %p233 = pneg %p143
      %p234 = pneg %p140
      %p235 = pneg %p169
      %p236 = pneg %p166
      %p237 = scmp.lt.s32.totalorder %s17, 1
      %s238 = scalar_select %p237, %s17, 1
      %s239 = smul.addr %s238, 2
      %s240 = smul.addr %s239, 4
      %s241 = scalar_lea.vmem %s6, %s240
      %p242 = scmp.lt.s32.totalorder %s17, 1
      %s243 = scalar_select %p242, %s17, 1
      %s244 = smul.addr %s243, 2
      %s245 = smul.addr %s244, 4
      %s246 = scalar_lea.vmem %s0, %s245
      %p247 = scmp.lt.s32.totalorder %s17, 1
      %s248 = scalar_select %p247, %s17, 1
      %s249 = smul.addr %s248, 2
      %s250 = smul.addr %s249, 4
      %s251 = scalar_lea.vmem %s6, %s250
      %v252 = vld [vmem:[%s2] sm:$0xf]
      %v253 = vld [vmem:[%s4] sm:$0xf]
      %v254 = vld [vmem:[%s3] sm:$0xf]
      %v255 = vld [vmem:[%s5] sm:$0xf]
      %v256 = vld [vmem:[%s1] sm:$0x3]
      %s257 = scalar_lea.vmem %s1, 2
      %v258 = vld [vmem:[%s257] sm:$0x3]
      %s259 = scalar_lea.vmem %s1, 4
      %v260 = vld [vmem:[%s259] sm:$0x3]
      %s261 = scalar_lea.vmem %s1, 6
      %v262 = vld [vmem:[%s261] sm:$0x3]
      %s263 = scalar_lea.vmem %s1, 10
      %v264 = vld [vmem:[%s263] sm:$0x3]
      %s265 = scalar_lea.vmem %s1, 12
      %v266 = vld [vmem:[%s265] sm:$0x3]
      %s267 = scalar_lea.vmem %s1, 14
      %v268 = vld [vmem:[%s267] sm:$0x3]
      %s269 = scalar_lea.vmem %s1, 16
      %v270 = vld [vmem:[%s269] sm:$0x3]
      %v271 = vld [vmem:[%s246] sm:$0xff]
      %v273 = vcombine.high %v271, %v271
      %275 = vrot.lane.b32.xlu0 %v271, 17
      %v276 = vpop.permute.xlu0 %275
      %277 = vrot.lane.b32.xlu0 %v273, 17
      %v278 = vpop.permute.xlu0 %277
      %v279 = vlaneseq
      %v280 = vand.u32 %v279, 127
      %vm281 = vcmp.lt.s32.totalorder %v280, 17
      %v282 = vsel %vm281, %v276, %v278
      %v283 = vsel %vm281, %v278, %v276
      %v285 = vlaneseq
      %v286 = vshrl.u32 %v285, 7
      %v287 = vsub.s32 0, %v286
      %v288 = vrot.slane %v256, %v287
      %v289 = vlaneseq
      %v290 = vshrl.u32 %v289, 7
      %v291 = vsub.s32 1, %v290
      %v292 = vrot.slane %v256, %v291
      %v295 = vmul.f32 %v283, %v288
      %v296 = vmul.f32 %v282, %v292
      %297 = vst [vmem:[#allocation2] sm:$0xf] %v295
      %298 = vst [vmem:[#allocation2 + $0x8] sm:$0xf] %v296
      %299 = vrot.lane.b32.xlu0 %v271, 16
      %v300 = vpop.permute.xlu0 %299
      %301 = vrot.lane.b32.xlu0 %v273, 16
      %v302 = vpop.permute.xlu0 %301
      %vm303 = vcmp.lt.s32.totalorder %v280, 16
      %v304 = vsel %vm303, %v300, %v302
      %v305 = vsel %vm303, %v302, %v300
      %v307 = vlaneseq
      %v308 = vshrl.u32 %v307, 7
      %v309 = vsub.s32 0, %v308
      %v310 = vrot.slane %v258, %v309
      %v311 = vlaneseq
      %v312 = vshrl.u32 %v311, 7
      %v313 = vsub.s32 1, %v312
      %v314 = vrot.slane %v258, %v313
      %v317 = vmul.f32 %v305, %v310
      %v318 = vmul.f32 %v304, %v314
      %v321 = vrot.slane %v317, 4
      %v322 = vrot.slane %v318, 4
      %325 = vst [vmem:[#allocation2] sm:$0xf0] %v321
      %326 = vst [vmem:[#allocation2 + $0x8] sm:$0xf0] %v322
      %327 = vrot.lane.b32.xlu0 %v271, 15
      %v328 = vpop.permute.xlu0 %327
      %329 = vrot.lane.b32.xlu0 %v273, 15
      %v330 = vpop.permute.xlu0 %329
      %vm331 = vcmp.lt.s32.totalorder %v280, 15
      %v332 = vsel %vm331, %v328, %v330
      %v333 = vsel %vm331, %v330, %v328
      %v335 = vlaneseq
      %v336 = vshrl.u32 %v335, 7
      %v337 = vsub.s32 0, %v336
      %v338 = vrot.slane %v260, %v337
      %v339 = vlaneseq
      %v340 = vshrl.u32 %v339, 7
      %v341 = vsub.s32 1, %v340
      %v342 = vrot.slane %v260, %v341
      %v345 = vmul.f32 %v333, %v338
      %v346 = vmul.f32 %v332, %v342
      %347 = vst [vmem:[#allocation2 + $0x10] sm:$0xf] %v345
      %348 = vst [vmem:[#allocation2 + $0x18] sm:$0xf] %v346
      %349 = vrot.lane.b32.xlu0 %v271, 1
      %v350 = vpop.permute.xlu0 %349
      %351 = vrot.lane.b32.xlu0 %v273, 1
      %v352 = vpop.permute.xlu0 %351
      %vm353 = vcmp.lt.s32.totalorder %v280, 1
      %v354 = vsel %vm353, %v350, %v352
      %v355 = vsel %vm353, %v352, %v350
      %v357 = vlaneseq
      %v358 = vshrl.u32 %v357, 7
      %v359 = vsub.s32 0, %v358
      %v360 = vrot.slane %v262, %v359
      %v361 = vlaneseq
      %v362 = vshrl.u32 %v361, 7
      %v363 = vsub.s32 1, %v362
      %v364 = vrot.slane %v262, %v363
      %v367 = vmul.f32 %v355, %v360
      %v368 = vmul.f32 %v354, %v364
      %v371 = vrot.slane %v367, 4
      %v372 = vrot.slane %v368, 4
      %375 = vst [vmem:[#allocation2 + $0x10] sm:$0xf0] %v371
      %376 = vst [vmem:[#allocation2 + $0x18] sm:$0xf0] %v372
      %377 = vst [vmem:[#allocation2 + $0x20] sm:$0xf] %v271
      %378 = vst [vmem:[#allocation2 + $0x28] sm:$0xf] %v273
      %379 = vrot.lane.b32.xlu0 %v271, 127
      %v380 = vpop.permute.xlu0 %379
      %381 = vrot.lane.b32.xlu0 %v273, 127
      %v382 = vpop.permute.xlu0 %381
      %vm383 = vcmp.lt.s32.totalorder %v280, 127
      %v384 = vsel %vm383, %v380, %v382
      %v385 = vsel %vm383, %v382, %v380
      %v387 = vlaneseq
      %v388 = vshrl.u32 %v387, 7
      %v389 = vsub.s32 0, %v388
      %v390 = vrot.slane %v264, %v389
      %v391 = vlaneseq
      %v392 = vshrl.u32 %v391, 7
      %v393 = vsub.s32 1, %v392
      %v394 = vrot.slane %v264, %v393
      %v397 = vmul.f32 %v384, %v390
      %v398 = vmul.f32 %v385, %v394
      %v401 = vrot.slane %v397, 4
      %v402 = vrot.slane %v398, 4
      %405 = vst [vmem:[#allocation2 + $0x20] sm:$0xf0] %v401
      %406 = vst [vmem:[#allocation2 + $0x28] sm:$0xf0] %v402
      %407 = vrot.lane.b32.xlu0 %v271, 113
      %v408 = vpop.permute.xlu0 %407
      %409 = vrot.lane.b32.xlu0 %v273, 113
      %v410 = vpop.permute.xlu0 %409
      %vm411 = vcmp.lt.s32.totalorder %v280, 113
      %v412 = vsel %vm411, %v408, %v410
      %v413 = vsel %vm411, %v410, %v408
      %v415 = vlaneseq
      %v416 = vshrl.u32 %v415, 7
      %v417 = vsub.s32 0, %v416
      %v418 = vrot.slane %v266, %v417
      %v419 = vlaneseq
      %v420 = vshrl.u32 %v419, 7
      %v421 = vsub.s32 1, %v420
      %v422 = vrot.slane %v266, %v421
      %v425 = vmul.f32 %v412, %v418
      %v426 = vmul.f32 %v413, %v422
      %427 = vst [vmem:[#allocation2 + $0x30] sm:$0xf] %v425
      %428 = vst [vmem:[#allocation2 + $0x38] sm:$0xf] %v426
      %429 = vrot.lane.b32.xlu0 %v271, 112
      %v430 = vpop.permute.xlu0 %429
      %431 = vrot.lane.b32.xlu0 %v273, 112
      %v432 = vpop.permute.xlu0 %431
      %vm433 = vcmp.lt.s32.totalorder %v280, 112
      %v434 = vsel %vm433, %v430, %v432
      %v435 = vsel %vm433, %v432, %v430
      %v437 = vlaneseq
      %v438 = vshrl.u32 %v437, 7
      %v439 = vsub.s32 0, %v438
      %v440 = vrot.slane %v268, %v439
      %v441 = vlaneseq
      %v442 = vshrl.u32 %v441, 7
      %v443 = vsub.s32 1, %v442
      %v444 = vrot.slane %v268, %v443
      %v447 = vmul.f32 %v434, %v440
      %v448 = vmul.f32 %v435, %v444
      %v451 = vrot.slane %v447, 4
      %v452 = vrot.slane %v448, 4
      %455 = vst [vmem:[#allocation2 + $0x30] sm:$0xf0] %v451
      %456 = vst [vmem:[#allocation2 + $0x38] sm:$0xf0] %v452
      %457 = vrot.lane.b32.xlu0 %v271, 111
      %v458 = vpop.permute.xlu0 %457
      %459 = vrot.lane.b32.xlu0 %v273, 111
      %v460 = vpop.permute.xlu0 %459
      %vm461 = vcmp.lt.s32.totalorder %v280, 111
      %v462 = vsel %vm461, %v458, %v460
      %v463 = vsel %vm461, %v460, %v458
      %v465 = vlaneseq
      %v466 = vshrl.u32 %v465, 7
      %v467 = vsub.s32 0, %v466
      %v468 = vrot.slane %v270, %v467
      %v469 = vlaneseq
      %v470 = vshrl.u32 %v469, 7
      %v471 = vsub.s32 1, %v470
      %v472 = vrot.slane %v270, %v471
      %v475 = vmul.f32 %v462, %v468
      %v476 = vmul.f32 %v463, %v472
      %477 = vst [vmem:[#allocation2 + $0x40] sm:$0xf] %v475
      %478 = vst [vmem:[#allocation2 + $0x48] sm:$0xf] %v476
      %v479 = vld [vmem:[#allocation2] sm:$0xff]
      %v480 = vld [vmem:[#allocation2 + $0x8] sm:$0xff]
      %v481 = vld [vmem:[#allocation2 + $0x10] sm:$0xff]
      %v482 = vld [vmem:[#allocation2 + $0x18] sm:$0xff]
      %v483 = vld [vmem:[#allocation2 + $0x20] sm:$0xff]
      %v484 = vld [vmem:[#allocation2 + $0x28] sm:$0xff]
      %v485 = vld [vmem:[#allocation2 + $0x30] sm:$0xff]
      %v486 = vld [vmem:[#allocation2 + $0x38] sm:$0xff]
      %v487 = vld [vmem:[#allocation2 + $0x40] sm:$0xf]
      %v488 = vld [vmem:[#allocation2 + $0x48] sm:$0xf]
      %490 = vset.pattern.permute.xlu0 0
      %491 = vperm.xlu0 %490, %v254
      %v492 = vpop.permute.xlu0 %491
      %vm494 = vcmask 293888
      %v496 = vsel %vm494, %v252, 0
      %vm498 = vcmask 1043456
      %v500 = vsel %vm498, %v487, 0
      %v503 = vsel %vm498, %v488, 0
      %505 = vmatprep.subr.mxu0 %v480
      %506 = vmatpush1.msra.mxu0 %v479
      %507 = vmatprep.subr.mxu0 %v482
      %508 = vmatpush1.msra.mxu0 %v481
      %509 = vmatprep.subr.mxu0 %v484
      %510 = vmatpush1.msra.mxu0 %v483
      %511 = vmatprep.subr.mxu0 %v486
      %512 = vmatpush1.msra.mxu0 %v485
      %513 = vmatprep.subr.mxu0 %v503
      %514 = vmatpush1.msra.mxu0 %v500
      %515 = vmatprep.subr.mxu0 0.0
      %516 = vmatpush1.msra.mxu0 0.0
      %517 = vmatprep.subr.mxu0 0.0
      %518 = vmatpush1.msra.mxu0 0.0
      %519 = vmatprep.subr.mxu0 0.0
      %520 = vmatpush1.msra.mxu0 0.0
      %521 = vmatprep.subr.mxu0 0.0
      %522 = vmatpush1.msra.mxu0 0.0
      %523 = vmatprep.subr.mxu0 0.0
      %524 = vmatpush1.msra.mxu0 0.0
      %525 = vmatprep.subr.mxu0 0.0
      %526 = vmatpush1.msra.mxu0 0.0
      %527 = vmatprep.subr.mxu0 0.0
      %528 = vmatpush1.msra.mxu0 0.0
      %529 = vmatprep.subr.mxu0 0.0
      %530 = vmatpush1.msra.mxu0 0.0
      %531 = vmatprep.subr.mxu0 0.0
      %532 = vmatpush1.msra.mxu0 0.0
      %533 = vmatprep.subr.mxu0 0.0
      %534 = vmatpush1.msra.mxu0 0.0
      %535 = vmatprep.subr.mxu0 0.0
      %536 = vmatpush1.msra.mxu0 0.0
      %537 = vmatprep.subr.mxu0 0.0
      %538 = vmatpush1.msra.mxu0 0.0
      %539 = vmatprep.subr.mxu0 0.0
      %540 = vmatpush1.msra.mxu0 0.0
      %541 = vmatprep.subr.mxu0 0.0
      %542 = vmatpush1.msra.mxu0 0.0
      %543 = vmatprep.subr.mxu0 0.0
      %544 = vmatpush1.msra.mxu0 0.0
      %545 = vmatprep.subr.mxu0 0.0
      %546 = vmatpush1.msra.mxu0 0.0
      %547 = vmatprep.subr.mxu0 0.0
      %548 = vmatpush1.msra.mxu0 0.0
      %549 = vmatprep.subr.mxu0 0.0
      %550 = vmatpush1.msra.mxu0 0.0
      %551 = vmatprep.subr.mxu0 0.0
      %552 = vmatpush1.msra.mxu0 0.0
      %553 = vmatprep.subr.mxu0 0.0
      %554 = vmatpush1.msra.mxu0 0.0
      %555 = vmatprep.subr.mxu0 0.0
      %556 = vmatpush1.msra.mxu0 0.0
      %557 = vmatprep.subr.mxu0 0.0
      %558 = vmatpush1.msra.mxu0 0.0
      %559 = vmatprep.subr.mxu0 0.0
      %560 = vmatpush1.msra.mxu0 0.0
      %561 = vmatprep.subr.mxu0 0.0
      %562 = vmatpush1.msra.mxu0 0.0
      %563 = vmatprep.subr.mxu0 0.0
      %564 = vmatpush1.msra.mxu0 0.0
      %565 = vmatprep.subr.mxu0 0.0
      %566 = vmatpush1.msra.mxu0 0.0
      %567 = vmatprep.subr.mxu0 0.0
      %568 = vmatpush1.msra.mxu0 0.0
      %569 = vmatprep.mubr.f32.mxu0 0.0
      %570 = vmatmul.mubr.f32.gmra.mrb[0].mxu0 %v496
      %v571 = vpop.f32.mrb[0].mxu0
      %v572 = vadd.f32 %v492, %v571
      %v573 = vpop.f32.mrb[0].mxu0
      %v574 = vadd.f32 %v492, %v573
      %575 = vdwg.mxu0
      %v576 = vmax.f32 %v572, 0.0
      %v577 = vmax.f32 %v574, 0.0
      %578 = vrot.lane.b32.xlu0 %v576, 17
      %v579 = vpop.permute.xlu0 %578
      %580 = vrot.lane.b32.xlu0 %v577, 17
      %v581 = vpop.permute.xlu0 %580
      %v582 = vsel %vm281, %v579, %v581
      %v583 = vsel %vm281, %v581, %v579
      %v584 = vmul.f32 %v583, %v288
      %v585 = vmul.f32 %v582, %v292
      %586 = vst [vmem:[#allocation2] sm:$0xf] %v584
      %587 = vst [vmem:[#allocation2 + $0x8] sm:$0xf] %v585
      %588 = vrot.lane.b32.xlu0 %v576, 16
      %v589 = vpop.permute.xlu0 %588
      %590 = vrot.lane.b32.xlu0 %v577, 16
      %v591 = vpop.permute.xlu0 %590
      %v592 = vsel %vm303, %v589, %v591
      %v593 = vsel %vm303, %v591, %v589
      %v594 = vmul.f32 %v593, %v310
      %v595 = vmul.f32 %v592, %v314
      %v598 = vrot.slane %v594, 4
      %v599 = vrot.slane %v595, 4
      %602 = vst [vmem:[#allocation2] sm:$0xf0] %v598
      %603 = vst [vmem:[#allocation2 + $0x8] sm:$0xf0] %v599
      %604 = vrot.lane.b32.xlu0 %v576, 15
      %v605 = vpop.permute.xlu0 %604
      %606 = vrot.lane.b32.xlu0 %v577, 15
      %v607 = vpop.permute.xlu0 %606
      %v608 = vsel %vm331, %v605, %v607
      %v609 = vsel %vm331, %v607, %v605
      %v610 = vmul.f32 %v609, %v338
      %v611 = vmul.f32 %v608, %v342
      %612 = vst [vmem:[#allocation2 + $0x10] sm:$0xf] %v610
      %613 = vst [vmem:[#allocation2 + $0x18] sm:$0xf] %v611
      %614 = vrot.lane.b32.xlu0 %v576, 1
      %v615 = vpop.permute.xlu0 %614
      %616 = vrot.lane.b32.xlu0 %v577, 1
      %v617 = vpop.permute.xlu0 %616
      %v618 = vsel %vm353, %v615, %v617
      %v619 = vsel %vm353, %v617, %v615
      %v620 = vmul.f32 %v619, %v360
      %v621 = vmul.f32 %v618, %v364
      %v624 = vrot.slane %v620, 4
      %v625 = vrot.slane %v621, 4
      %628 = vst [vmem:[#allocation2 + $0x10] sm:$0xf0] %v624
      %629 = vst [vmem:[#allocation2 + $0x18] sm:$0xf0] %v625
      %630 = vst [vmem:[#allocation2 + $0x20] sm:$0xf] %v576
      %631 = vst [vmem:[#allocation2 + $0x28] sm:$0xf] %v577
      %632 = vrot.lane.b32.xlu0 %v576, 127
      %v633 = vpop.permute.xlu0 %632
      %634 = vrot.lane.b32.xlu0 %v577, 127
      %v635 = vpop.permute.xlu0 %634
      %v636 = vsel %vm383, %v633, %v635
      %v637 = vsel %vm383, %v635, %v633
      %v638 = vmul.f32 %v636, %v390
      %v639 = vmul.f32 %v637, %v394
      %v642 = vrot.slane %v638, 4
      %v643 = vrot.slane %v639, 4
      %646 = vst [vmem:[#allocation2 + $0x20] sm:$0xf0] %v642
      %647 = vst [vmem:[#allocation2 + $0x28] sm:$0xf0] %v643
      %648 = vrot.lane.b32.xlu0 %v576, 113
      %v649 = vpop.permute.xlu0 %648
      %650 = vrot.lane.b32.xlu0 %v577, 113
      %v651 = vpop.permute.xlu0 %650
      %v652 = vsel %vm411, %v649, %v651
      %v653 = vsel %vm411, %v651, %v649
      %v654 = vmul.f32 %v652, %v418
      %v655 = vmul.f32 %v653, %v422
      %656 = vst [vmem:[#allocation2 + $0x30] sm:$0xf] %v654
      %657 = vst [vmem:[#allocation2 + $0x38] sm:$0xf] %v655
      %658 = vrot.lane.b32.xlu0 %v576, 112
      %v659 = vpop.permute.xlu0 %658
      %660 = vrot.lane.b32.xlu0 %v577, 112
      %v661 = vpop.permute.xlu0 %660
      %v662 = vsel %vm433, %v659, %v661
      %v663 = vsel %vm433, %v661, %v659
      %v664 = vmul.f32 %v662, %v440
      %v665 = vmul.f32 %v663, %v444
      %v668 = vrot.slane %v664, 4
      %v669 = vrot.slane %v665, 4
      %672 = vst [vmem:[#allocation2 + $0x30] sm:$0xf0] %v668
      %673 = vst [vmem:[#allocation2 + $0x38] sm:$0xf0] %v669
      %674 = vrot.lane.b32.xlu0 %v576, 111
      %v675 = vpop.permute.xlu0 %674
      %676 = vrot.lane.b32.xlu0 %v577, 111
      %v677 = vpop.permute.xlu0 %676
      %v678 = vsel %vm461, %v675, %v677
      %v679 = vsel %vm461, %v677, %v675
      %v680 = vmul.f32 %v678, %v468
      %v681 = vmul.f32 %v679, %v472
      %682 = vst [vmem:[#allocation2 + $0x40] sm:$0xf] %v680
      %683 = vst [vmem:[#allocation2 + $0x48] sm:$0xf] %v681
      %v684 = vld [vmem:[#allocation2] sm:$0xff]
      %v685 = vld [vmem:[#allocation2 + $0x8] sm:$0xff]
      %v686 = vld [vmem:[#allocation2 + $0x10] sm:$0xff]
      %v687 = vld [vmem:[#allocation2 + $0x18] sm:$0xff]
      %v688 = vld [vmem:[#allocation2 + $0x20] sm:$0xff]
      %v689 = vld [vmem:[#allocation2 + $0x28] sm:$0xff]
      %v690 = vld [vmem:[#allocation2 + $0x30] sm:$0xff]
      %v691 = vld [vmem:[#allocation2 + $0x38] sm:$0xff]
      %v692 = vld [vmem:[#allocation2 + $0x40] sm:$0xf]
      %v693 = vld [vmem:[#allocation2 + $0x48] sm:$0xf]
      %695 = vset.pattern.permute.xlu0 0
      %696 = vperm.xlu0 %695, %v255
      %v697 = vpop.permute.xlu0 %696
      %v700 = vsel %vm494, %v253, 0
      %v703 = vsel %vm498, %v692, 0
      %v706 = vsel %vm498, %v693, 0
      %708 = vmatprep.subr.mxu0 %v685
      %709 = vmatpush1.msra.mxu0 %v684
      %710 = vmatprep.subr.mxu0 %v687
      %711 = vmatpush1.msra.mxu0 %v686
      %712 = vmatprep.subr.mxu0 %v689
      %713 = vmatpush1.msra.mxu0 %v688
      %714 = vmatprep.subr.mxu0 %v691
      %715 = vmatpush1.msra.mxu0 %v690
      %716 = vmatprep.subr.mxu0 %v706
      %717 = vmatpush1.msra.mxu0 %v703
      %718 = vmatprep.subr.mxu0 0.0
      %719 = vmatpush1.msra.mxu0 0.0
      %720 = vmatprep.subr.mxu0 0.0
      %721 = vmatpush1.msra.mxu0 0.0
      %722 = vmatprep.subr.mxu0 0.0
      %723 = vmatpush1.msra.mxu0 0.0
      %724 = vmatprep.subr.mxu0 0.0
      %725 = vmatpush1.msra.mxu0 0.0
      %726 = vmatprep.subr.mxu0 0.0
      %727 = vmatpush1.msra.mxu0 0.0
      %728 = vmatprep.subr.mxu0 0.0
      %729 = vmatpush1.msra.mxu0 0.0
      %730 = vmatprep.subr.mxu0 0.0
      %731 = vmatpush1.msra.mxu0 0.0
      %732 = vmatprep.subr.mxu0 0.0
      %733 = vmatpush1.msra.mxu0 0.0
      %734 = vmatprep.subr.mxu0 0.0
      %735 = vmatpush1.msra.mxu0 0.0
      %736 = vmatprep.subr.mxu0 0.0
      %737 = vmatpush1.msra.mxu0 0.0
      %738 = vmatprep.subr.mxu0 0.0
      %739 = vmatpush1.msra.mxu0 0.0
      %740 = vmatprep.subr.mxu0 0.0
      %741 = vmatpush1.msra.mxu0 0.0
      %742 = vmatprep.subr.mxu0 0.0
      %743 = vmatpush1.msra.mxu0 0.0
      %744 = vmatprep.subr.mxu0 0.0
      %745 = vmatpush1.msra.mxu0 0.0
      %746 = vmatprep.subr.mxu0 0.0
      %747 = vmatpush1.msra.mxu0 0.0
      %748 = vmatprep.subr.mxu0 0.0
      %749 = vmatpush1.msra.mxu0 0.0
      %750 = vmatprep.subr.mxu0 0.0
      %751 = vmatpush1.msra.mxu0 0.0
      %752 = vmatprep.subr.mxu0 0.0
      %753 = vmatpush1.msra.mxu0 0.0
      %754 = vmatprep.subr.mxu0 0.0
      %755 = vmatpush1.msra.mxu0 0.0
      %756 = vmatprep.subr.mxu0 0.0
      %757 = vmatpush1.msra.mxu0 0.0
      %758 = vmatprep.subr.mxu0 0.0
      %759 = vmatpush1.msra.mxu0 0.0
      %760 = vmatprep.subr.mxu0 0.0
      %761 = vmatpush1.msra.mxu0 0.0
      %762 = vmatprep.subr.mxu0 0.0
      %763 = vmatpush1.msra.mxu0 0.0
      %764 = vmatprep.subr.mxu0 0.0
      %765 = vmatpush1.msra.mxu0 0.0
      %766 = vmatprep.subr.mxu0 0.0
      %767 = vmatpush1.msra.mxu0 0.0
      %768 = vmatprep.subr.mxu0 0.0
      %769 = vmatpush1.msra.mxu0 0.0
      %770 = vmatprep.subr.mxu0 0.0
      %771 = vmatpush1.msra.mxu0 0.0
      %772 = vmatprep.mubr.f32.mxu0 0.0
      %773 = vmatmul.mubr.f32.gmra.mrb[0].mxu0 %v700
      %v774 = vpop.f32.mrb[0].mxu0
      %v775 = vadd.f32 %v697, %v774
      %v776 = vpop.f32.mrb[0].mxu0
      %v777 = vadd.f32 %v697, %v776
      %778 = vdwg.mxu0
      %v781 = vcombine.low %v775, %v777
      %v783 = vadd.f32 %v271, %v781
      %v784 = vmax.f32 %v783, 0.0
      %785 = vst [vmem:[%s251] sm:$0xff] %v784
      %p786 = scmp.lt.s32.totalorder %s17, 1
      %s787 = scalar_select %p786, %s17, 1
      %s788 = smul.addr %s787, 2
      %s789 = smul.addr %s788, 4
      %s790 = scalar_lea.vmem %s6, %s789
      // Predicated region
      $region45: #{resblock_forward.1} parent=43 // pred_check
        %p791 = pneg %p166
      $region46: #{resblock_forward.1} parent=43 // pred_check_branch
        %793 = sbr.rel (%p791) target = $region48
      $region47: #{resblock_forward.1} parent=43 // pred_region
        _
      $region48: #{resblock_forward.1} parent=43 // pred_fallthru
        _
    $region44: #{resblock_forward.1} parent=5 // pred_fallthru
      _
    %p794 = scmp.le.s32.totalorder 2, %s12
    // Predicated region
    $region49: #{resblock_forward.1} parent=5 // pred_check
      %p795 = pneg %p794
    $region50: #{resblock_forward.1} parent=5 // pred_check_branch
      %797 = sbr.rel (%p795) target = $region52
    $region51: #{resblock_forward.1} parent=5 // pred_region
      %s798 = ssub.s32 %s12, 2
      // Predicated region
      $region53: #{resblock_forward.1} parent=51 // pred_check
        %p799 = pneg %p172
      $region54: #{resblock_forward.1} parent=51 // pred_check_branch
        %801 = sbr.rel (%p799) target = $region56
      $region55: #{resblock_forward.1} parent=51 // pred_region
        %p802 = scmp.lt.s32.totalorder %s18, 1
        %s803 = scalar_select %p802, %s18, 1
        %s804 = smul.addr %s803, 2
        %s805 = smul.addr %s804, 4
        %s806 = scalar_lea.vmem %s6, %s805
      $region56: #{resblock_forward.1} parent=51 // pred_fallthru
        _
    $region52: #{resblock_forward.1} parent=5 // pred_fallthru
      _
  $region6: #{resblock_forward.1} parent=0 // loop_footer
    %s16 = sadd.s32 1, %s12
  $region7: #{resblock_forward.1} parent=0 // loop_footer_branch
    %11 = sbr.rel target = $region3
  $region8: #{resblock_forward.1} parent=0 // loop_exit
    _

</llo_original>
